<compile_context>
chip_gen: v7x
topology: tpu7x:2x2x1
jax: 0.10.0
libtpu: 0.0.40
codegen_flags: <defaults>
</compile_context>

<pallas_src>
import functools

import jax
import jax.numpy as jnp
import numpy as np
from jax.experimental import pallas as pl
from jax.experimental.pallas import tpu as pltpu


def _round_up(x, m):
    return ((x + m - 1) // m) * m


def _cdiv(a, b):
    return -(-a // b)


# ----------------------------------------------------------------------------
# Kernels
# ----------------------------------------------------------------------------
def _fused_linear_kernel(x_ref, wt_ref, b_ref, o_ref, *, apply_relu):
    """Single K block: out = relu?(x @ wt + bias), fused epilogue, one store."""
    acc = jnp.dot(x_ref[...], wt_ref[...], preferred_element_type=jnp.float32)
    acc = acc + b_ref[...]                       # (TM, Npad) + (1, Npad)
    if apply_relu:                               # static: 'relu' in type
        acc = jnp.maximum(acc, 0.0)
    o_ref[...] = acc.astype(o_ref.dtype)


def _fused_linear_kernel_ktiled(x_ref, wt_ref, b_ref, o_ref, acc_ref, *,
                                apply_relu):
    """K-tiled variant: f32 accumulator scratch; epilogue + store at k==last."""
    k = pl.program_id(1)

    @pl.when(k == 0)
    def _():
        acc_ref[...] = jnp.zeros_like(acc_ref)

    acc_ref[...] += jnp.dot(x_ref[...], wt_ref[...],
                            preferred_element_type=jnp.float32)

    @pl.when(k == pl.num_programs(1) - 1)
    def _():
        out = acc_ref[...] + b_ref[...]
        if apply_relu:
            out = jnp.maximum(out, 0.0)
        o_ref[...] = out.astype(o_ref.dtype)


# ----------------------------------------------------------------------------
# One-time weight packing (hoisted out of the per-call path)
# ----------------------------------------------------------------------------
def prepare_qshared_head(encoder_params, *, compute_dtype=jnp.bfloat16,
                         n_align=128, max_weight_block_mib=8.0):
    """Pack the encoder weights once.

    encoder_params: list of (W_i, b_i), W_i: (out_i, in_f), b_i: (out_i,)
                    -- one entry per encoder in self.encoders.
    compute_dtype:  MXU input dtype (bf16 default; accumulation stays f32).
    n_align:        output-dim padding grain (128; pass 256 on v6e/v7x when
                    compute-bound to match the 256x256 MXU).
    max_weight_block_mib: per-buffer VMEM budget for one weight tile; larger
                    flattened inputs trigger the K-tiled accumulator path.
    """
    w = jnp.concatenate([jnp.asarray(p[0], jnp.float32) for p in encoder_params],
                        axis=0)                          # (out_f, in_f)
    b = jnp.concatenate([jnp.asarray(p[1], jnp.float32) for p in encoder_params],
                        axis=0)                          # (out_f,)
    out_f, in_f = w.shape

    itemsize = jnp.dtype(compute_dtype).itemsize
    out_pad = _round_up(out_f, n_align)                  # lane-dense N
    in_pad0 = _round_up(in_f, 128)                       # MXU-aligned K

    budget = int(max_weight_block_mib * (1 << 20))
    if in_pad0 * out_pad * itemsize <= budget:
        tk, num_k = in_pad0, 1                           # single resident block
    else:
        tk = max(128, (budget // (out_pad * itemsize)) // 128 * 128)
        num_k = _cdiv(in_pad0, tk)
    in_pad = num_k * tk

    # Zero padding is exact (padded bias = 0, padded rows/cols sliced off).
    wt = jnp.pad(w.T, ((0, in_pad - in_f), (0, out_pad - out_f)))
    wt = wt.astype(compute_dtype)                        # cached in compute dtype
    bias = jnp.pad(b, (0, out_pad - out_f)).astype(jnp.float32).reshape(1, out_pad)

    return {
        "wt": wt, "bias": bias,
        "in_features": int(in_f), "out_features": int(out_f),
        "in_pad": int(in_pad), "out_pad": int(out_pad),
        "tk": int(tk), "num_k": int(num_k),
        "compute_dtype": jnp.dtype(compute_dtype),
    }


def _resident_spec(block_shape, index_map):
    """Constant-index BlockSpec, single-buffered when supported.

    Halves the resident weight footprint (important on v7x's 64 MiB VMEM);
    falls back to a default (double-buffered) spec on jax versions without
    BlockSpec.pipeline_mode.
    """
    try:
        return pl.BlockSpec(block_shape, index_map, pipeline_mode=pl.Buffered(1))
    except (TypeError, AttributeError):
        return pl.BlockSpec(block_shape, index_map)


# ----------------------------------------------------------------------------
# Forward
# ----------------------------------------------------------------------------
def qshared_head_forward(x, prepared, *, relu=False, max_batch_tile=512,
                         trim_output=True):
    """QsharedHead.forward with cached packed weights.

    x:        (..., C, H, W) float32 -- arbitrary leading dims (nn.Flatten(-3,-1)).
    prepared: output of prepare_qshared_head().
    relu:     whether 'relu' is in the head type string.
    returns:  (..., sum(out_i)) float32 (or lane-padded if trim_output=False).
    """
    in_f = prepared["in_features"]
    out_f = prepared["out_features"]
    in_pad, out_pad = prepared["in_pad"], prepared["out_pad"]
    tk, num_k = prepared["tk"], prepared["num_k"]
    cdt = prepared["compute_dtype"]
    wt, bias = prepared["wt"], prepared["bias"]

    lead_shape = x.shape[:-3]
    assert int(np.prod(x.shape[-3:])) == in_f, "trailing dims mismatch"
    x2 = x.reshape(-1, in_f)                      # Flatten(-3,-1) + fold leading
    B = x2.shape[0]

    if x2.dtype != cdt:                           # skip no-op cast
        x2 = x2.astype(cdt)

    # Batch tiling: grid collapses to 1 for small B; for large B the tile is
    # sized so batch padding waste is < 8 rows per tile.
    b8 = _round_up(max(B, 1), 8)
    num_bt = 1 if b8 <= max_batch_tile else _cdiv(b8, max_batch_tile)
    tm = _round_up(_cdiv(b8, num_bt), 8)
    b_pad = num_bt * tm

    if b_pad != B or in_pad != in_f:              # skip no-op pad
        x2 = jnp.pad(x2, ((0, b_pad - B), (0, in_pad - in_f)))

    itemsize = jnp.dtype(cdt).itemsize
    cost = pl.CostEstimate(
        flops=2 * b_pad * in_pad * out_pad,
        transcendentals=0,
        bytes_accessed=(b_pad * in_pad * itemsize + in_pad * out_pad * itemsize
                        + out_pad * 4 + b_pad * out_pad * 4),
    )
    # Conservative VMEM need (assume double buffering everywhere) + headroom,
    # capped at v7x's 64 MiB physical VMEM.
    vmem_need = (2 * tm * tk * itemsize + 2 * tk * out_pad * itemsize
                 + 2 * out_pad * 4 + 2 * tm * out_pad * 4
                 + (tm * out_pad * 4 if num_k > 1 else 0))
    vmem_limit = min(max(2 * vmem_need + (1 << 20), 32 << 20), 64 << 20)

    if num_k == 1:
        # Single resident (single-buffered) weight block; batch-parallel grid.
        out = pl.pallas_call(
            functools.partial(_fused_linear_kernel, apply_relu=relu),
            out_shape=jax.ShapeDtypeStruct((b_pad, out_pad), jnp.float32),
            grid=(num_bt,),
            in_specs=[
                pl.BlockSpec((tm, in_pad), lambda i: (i, 0)),
                _resident_spec((in_pad, out_pad), lambda i: (0, 0)),
                _resident_spec((1, out_pad), lambda i: (0, 0)),
            ],
            out_specs=pl.BlockSpec((tm, out_pad), lambda i: (i, 0)),
            compiler_params=pltpu.CompilerParams(
                dimension_semantics=("parallel",),
                vmem_limit_bytes=vmem_limit),
            cost_estimate=cost,
        )(x2, wt, bias)
    else:
        # K-tiled path: weight tiles (tk, out_pad) stream through VMEM; the
        # f32 accumulator lives in scratch; store happens once at k == last.
        out = pl.pallas_call(
            functools.partial(_fused_linear_kernel_ktiled, apply_relu=relu),
            out_shape=jax.ShapeDtypeStruct((b_pad, out_pad), jnp.float32),
            grid=(num_bt, num_k),
            in_specs=[
                pl.BlockSpec((tm, tk), lambda i, k: (i, k)),
                pl.BlockSpec((tk, out_pad), lambda i, k: (k, 0)),
                _resident_spec((1, out_pad), lambda i, k: (0, 0)),
            ],
            out_specs=pl.BlockSpec((tm, out_pad), lambda i, k: (i, 0)),
            scratch_shapes=[pltpu.VMEM((tm, out_pad), jnp.float32)],
            compiler_params=pltpu.CompilerParams(
                dimension_semantics=("parallel", "arbitrary"),
                vmem_limit_bytes=vmem_limit),
            cost_estimate=cost,
        )(x2, wt, bias)

    if b_pad != B:                                # strip batch padding only if any
        out = out[:B]
    if trim_output and out_pad != out_f:          # strip lane padding (optional)
        out = out[:, :out_f]
    return out.reshape(lead_shape + (out.shape[-1],))


# ----------------------------------------------------------------------------
# Demo / correctness checks
# ----------------------------------------------------------------------------
def _reference(x, encoder_params, relu):
    """Pure-JAX reference with the exact PyTorch-module semantics."""
    lead = x.shape[:-3]
    xf = x.reshape((-1, int(np.prod(x.shape[-3:]))))
    rep = jnp.concatenate([xf @ w.T + b for (w, b) in encoder_params], axis=-1)
    if relu:
        rep = jnp.maximum(rep, 0.0)
    return rep.reshape(lead + (rep.shape[-1],))


if __name__ == "__main__":
    # Dueling head with type='value advantage relu':
    #   two Linear encoders (value + advantage_hidden) -> concat -> ReLU.
    batch, channels, H, W = 2, 4, 16, 16
    in_f = channels * H * W                   # 1024
    enc_out = (128, 76)                       # concat -> 204 (not a 128 multiple)

    key = jax.random.PRNGKey(0)
    kx, kx2, k1, k2 = jax.random.split(key, 4)
    x = jax.random.normal(kx, (batch, channels, H, W), dtype=jnp.float32)

    # kaiming_uniform_(nonlinearity='linear') -> U(-sqrt(3/fan_in), +), zero bias
    bound = float(np.sqrt(3.0 / in_f))
    encoder_params = []
    for kw, of in zip((k1, k2), enc_out):
        w_i = jax.random.uniform(kw, (of, in_f), minval=-bound, maxval=bound,
                                 dtype=jnp.float32)
        b_i = jnp.zeros((of,), jnp.float32)
        encoder_params.append((w_i, b_i))

    ref = _reference(x, encoder_params, relu=True)

    # 1) Default path: cached bf16 weights, f32 accumulation.
    prepared_bf16 = prepare_qshared_head(encoder_params)
    out = jax.block_until_ready(qshared_head_forward(x, prepared_bf16, relu=True))
    assert out.shape == (batch, sum(enc_out))
    np.testing.assert_allclose(np.asarray(out), np.asarray(ref),
                               rtol=2e-2, atol=5e-2)

    # 2) f32 compute, single resident weight block: tight tolerance.
    prepared_f32 = prepare_qshared_head(encoder_params, compute_dtype=jnp.float32)
    out32 = jax.block_until_ready(qshared_head_forward(x, prepared_f32, relu=True))
    np.testing.assert_allclose(np.asarray(out32), np.asarray(ref),
                               rtol=1e-5, atol=1e-5)

    # 3) Tiny weight-block budget -> exercises the K-tiled accumulator path.
    prepared_kt = prepare_qshared_head(encoder_params, compute_dtype=jnp.float32,
                                       max_weight_block_mib=0.25)
    assert prepared_kt["num_k"] > 1
    out_kt = jax.block_until_ready(qshared_head_forward(x, prepared_kt, relu=True))
    np.testing.assert_allclose(np.asarray(out_kt), np.asarray(ref),
                               rtol=1e-5, atol=1e-5)

    # 4) Extra leading dims (nn.Flatten(-3, -1) preserves them).
    x5 = jax.random.normal(kx2, (3, batch, channels, H, W), dtype=jnp.float32)
    ref5 = _reference(x5, encoder_params, relu=True)
    out5 = jax.block_until_ready(qshared_head_forward(x5, prepared_bf16, relu=True))
    assert out5.shape == (3, batch, sum(enc_out))
    np.testing.assert_allclose(np.asarray(out5), np.asarray(ref5),
                               rtol=2e-2, atol=5e-2)

    print("KERNEL_OK")
</pallas_src>

<mosaic_0001>
module attributes {stable_mosaic.version = 11 : i64} {
  func.func @_fused_linear_kernel(%arg0: i32, %arg1: memref<8x1024xbf16, #tpu.memory_space<vmem>>, %arg2: memref<1024x256xbf16, #tpu.memory_space<vmem>>, %arg3: memref<1x256xf32, #tpu.memory_space<vmem>>, %arg4: memref<8x256xf32, #tpu.memory_space<vmem>>) attributes {dimension_semantics = [#tpu.dimension_semantics<parallel>], iteration_bounds = array<i64: 1>, scalar_prefetch = 0 : i64, scratch_operands = 0 : i64, tpu.core_type = #tpu.core_type<tc>, window_params = [{transform_indices = @transform_0, window_bounds = array<i64: 8, 1024>}, {pipeline_mode = #tpu.pipeline_mode<synchronous>, transform_indices = @transform_1, window_bounds = array<i64: 1024, 256>}, {pipeline_mode = #tpu.pipeline_mode<synchronous>, transform_indices = @transform_2, window_bounds = array<i64: 1, 256>}, {transform_indices = @transform_3, window_bounds = array<i64: 8, 256>}]} {
    %c0 = arith.constant 0 : index
    %c0_0 = arith.constant 0 : index
    %0 = vector.load %arg1[%c0, %c0_0] : memref<8x1024xbf16, #tpu.memory_space<vmem>>, vector<8x1024xbf16>
    %c0_1 = arith.constant 0 : index
    %c0_2 = arith.constant 0 : index
    %1 = vector.load %arg2[%c0_1, %c0_2] : memref<1024x256xbf16, #tpu.memory_space<vmem>>, vector<1024x256xbf16>
    %cst = arith.constant dense<0.000000e+00> : vector<8x256xf32>
    %2 = tpu.matmul %0, %1, %cst {dimension_numbers = #tpu.dot_dimension_numbers<[1], [0], [0], [1], [0, 0, 1, 1], [], []>} : vector<8x1024xbf16>, vector<1024x256xbf16>, vector<8x256xf32> -> vector<8x256xf32>
    %c0_3 = arith.constant 0 : index
    %c0_4 = arith.constant 0 : index
    %3 = vector.load %arg3[%c0_3, %c0_4] : memref<1x256xf32, #tpu.memory_space<vmem>>, vector<1x256xf32>
    %4 = vector.broadcast %3 : vector<1x256xf32> to vector<8x256xf32>
    %5 = arith.addf %2, %4 : vector<8x256xf32>
    %cst_5 = arith.constant 0.000000e+00 : f32
    %6 = vector.broadcast %cst_5 : f32 to vector<8x256xf32>
    %7 = arith.maximumf %5, %6 : vector<8x256xf32>
    %c0_6 = arith.constant 0 : index
    %c0_7 = arith.constant 0 : index
    %8 = vector.load %arg4[%c0_6, %c0_7] : memref<8x256xf32, #tpu.memory_space<vmem>>, vector<8x256xf32>
    tpu.vector_store %arg4[%c0_6, %c0_7], %7 {strides = array<i32>} : memref<8x256xf32, #tpu.memory_space<vmem>>, vector<8x256xf32>,
    return
  }
  func.func @transform_0(%arg0: i32) -> (i32, i32) {
    %c0_i32 = arith.constant 0 : i32
    %c0_i32_0 = arith.constant 0 : i32
    return %arg0, %c0_i32 : i32, i32
  }
  func.func @transform_1(%arg0: i32) -> (i32, i32) {
    %c0_i32 = arith.constant 0 : i32
    %c0_i32_0 = arith.constant 0 : i32
    %c0_i32_1 = arith.constant 0 : i32
    return %c0_i32, %c0_i32_0 : i32, i32
  }
  func.func @transform_2(%arg0: i32) -> (i32, i32) {
    %c0_i32 = arith.constant 0 : i32
    %c0_i32_0 = arith.constant 0 : i32
    %c0_i32_1 = arith.constant 0 : i32
    return %c0_i32, %c0_i32_0 : i32, i32
  }
  func.func @transform_3(%arg0: i32) -> (i32, i32) {
    %c0_i32 = arith.constant 0 : i32
    %c0_i32_0 = arith.constant 0 : i32
    return %arg0, %c0_i32 : i32, i32
  }
}

</mosaic_0001>

<llo_original>
// kernel: tpu_custom_call.1
$region0: #{tpu_custom_call.1}
  #allocation0 [shape = 'u32[]', space=smem, size = 0x4, offset = 0x4, fixed_abs, tag = 'smem constant byte address 0x4 - core index']
  #allocation1 [shape = 'u32[144,128]{1,0:T(1,128)}', space=vmem, size = 0x12000, scoped, tag = 'internal scratch']
  %s0 = inlined_call_operand.hbm [shape: bf16[8,1024], index: 0, kind: input, shape index: {}]
  %s1 = inlined_call_operand.hbm [shape: bf16[1024,256], index: 1, kind: input, shape index: {}]
  %s2 = inlined_call_operand.vmem [shape: f32[1,256], index: 2, kind: input, shape index: {}]
  %s3 = inlined_call_operand.hbm [shape: f32[8,256], index: 3, kind: output, shape index: {}]
  %s4 = sld [smem:[#allocation0]]
  $region30: #{tpu_custom_call.1} parent=0
    _
  %s6 = ssub.s32 1, %s4
  %s7 = scalar_select 0, %s6, %s4
  $region1: #{tpu_custom_call.1} parent=0
    #allocation2 [shape = 'u8[16384]{0}', space=vmem, size = 0x4000, scoped, tag = 'input window, operand 0, single buffered']
    #allocation3 [shape = 's32[1]{0}', space=sflag, size = 0x4, scoped, tag = 'scoped memory for tpu_custom_call.1']
    #allocation4 [shape = 's32[1]{0}', space=sflag, size = 0x4, scoped, tag = 'scoped memory for tpu_custom_call.1']
    #allocation5 [shape = 'u8[524288]{0}', space=vmem, size = 0x80000, scoped, tag = 'input window, operand 1, single buffered']
    #allocation6 [shape = 's32[1]{0}', space=sflag, size = 0x4, scoped, tag = 'scoped memory for tpu_custom_call.1']
    #allocation7 [shape = 'u8[8192]{0}', space=vmem, size = 0x2000, scoped, tag = 'output window, operand 0, single buffered']
    %8 = vsyncpa [#allocation3], 0
    %9 = vsyncpa [#allocation6], 0
    %10 = vsyncpa [#allocation4], 0
    // Predicated region
    $region2: #{tpu_custom_call.1} parent=1 // pred_check
      _
    $region3: #{tpu_custom_call.1} parent=1 // pred_check_branch
      %12 = sbr.rel (0) target = $region5
    $region4: #{tpu_custom_call.1} parent=1 // pred_region
      %s14 = ssub.s32 512, 512
      %15 = vsyncadd [#allocation3], %s14
      %s17 = sshll.u32 [#allocation2], 4
      %s18 = int_to_ptr.vmem [resolvable:$true] %s17
      %20 = dma.hbm_to_vmem [thread:$0]  %s0, 512, %s18, [#allocation3]
    $region5: #{tpu_custom_call.1} parent=1 // pred_fallthru
      _
    // Predicated region
    $region6: #{tpu_custom_call.1} parent=1 // pred_check
      _
    $region7: #{tpu_custom_call.1} parent=1 // pred_check_branch
      %22 = sbr.rel (0) target = $region9
    $region8: #{tpu_custom_call.1} parent=1 // pred_region
      %s24 = ssub.s32 16384, 16384
      %25 = vsyncadd [#allocation6], %s24
      %s26 = sshll.u32 [#allocation5], 4
      %s27 = int_to_ptr.vmem [resolvable:$true] %s26
      %32 = dma.hbm_to_vmem [thread:$0]  %s1, 16384, %s27, [#allocation6], 128, 128, 8
    $region9: #{tpu_custom_call.1} parent=1 // pred_fallthru
      _
    // Predicated region
    $region10: #{tpu_custom_call.1} parent=1 // pred_check
      _
    $region11: #{tpu_custom_call.1} parent=1 // pred_check_branch
      %34 = sbr.rel (0) target = $region13
    $region12: #{tpu_custom_call.1} parent=1 // pred_region
      _
    $region13: #{tpu_custom_call.1} parent=1 // pred_fallthru
      _
    // Predicated region
    $region14: #{tpu_custom_call.1} parent=1 // pred_check
      _
    $region15: #{tpu_custom_call.1} parent=1 // pred_check_branch
      %36 = sbr.rel (0) target = $region17
    $region16: #{tpu_custom_call.1} parent=1 // pred_region
      %37 = dma.done [#allocation3], 512
    $region17: #{tpu_custom_call.1} parent=1 // pred_fallthru
      _
    // Predicated region
    $region18: #{tpu_custom_call.1} parent=1 // pred_check
      _
    $region19: #{tpu_custom_call.1} parent=1 // pred_check_branch
      %39 = sbr.rel (0) target = $region21
    $region20: #{tpu_custom_call.1} parent=1 // pred_region
      %40 = dma.done [#allocation6], 16384
    $region21: #{tpu_custom_call.1} parent=1 // pred_fallthru
      _
    %v41 = vld [vmem:[#allocation2] sm:$0xff]
    %v42 = vld [vmem:[#allocation2 + $0x8] sm:$0xff]
    %v43 = vld [vmem:[#allocation2 + $0x10] sm:$0xff]
    %v44 = vld [vmem:[#allocation2 + $0x18] sm:$0xff]
    %v45 = vld [vmem:[#allocation5] sm:$0xff]
    %v46 = vld [vmem:[#allocation5 + $0x8] sm:$0xff]
    %v47 = vld [vmem:[#allocation5 + $0x10] sm:$0xff]
    %v48 = vld [vmem:[#allocation5 + $0x18] sm:$0xff]
    %v49 = vld [vmem:[#allocation5 + $0x20] sm:$0xff]
    %v50 = vld [vmem:[#allocation5 + $0x28] sm:$0xff]
    %v51 = vld [vmem:[#allocation5 + $0x30] sm:$0xff]
    %v52 = vld [vmem:[#allocation5 + $0x38] sm:$0xff]
    %v53 = vld [vmem:[#allocation5 + $0x40] sm:$0xff]
    %v54 = vld [vmem:[#allocation5 + $0x48] sm:$0xff]
    %v55 = vld [vmem:[#allocation5 + $0x50] sm:$0xff]
    %v56 = vld [vmem:[#allocation5 + $0x58] sm:$0xff]
    %v57 = vld [vmem:[#allocation5 + $0x60] sm:$0xff]
    %v58 = vld [vmem:[#allocation5 + $0x68] sm:$0xff]
    %v59 = vld [vmem:[#allocation5 + $0x70] sm:$0xff]
    %v60 = vld [vmem:[#allocation5 + $0x78] sm:$0xff]
    %v61 = vld [vmem:[#allocation5 + $0x80] sm:$0xff]
    %v62 = vld [vmem:[#allocation5 + $0x88] sm:$0xff]
    %v63 = vld [vmem:[#allocation5 + $0x90] sm:$0xff]
    %v64 = vld [vmem:[#allocation5 + $0x98] sm:$0xff]
    %v65 = vld [vmem:[#allocation5 + $0xa0] sm:$0xff]
    %v66 = vld [vmem:[#allocation5 + $0xa8] sm:$0xff]
    %v67 = vld [vmem:[#allocation5 + $0xb0] sm:$0xff]
    %v68 = vld [vmem:[#allocation5 + $0xb8] sm:$0xff]
    %v69 = vld [vmem:[#allocation5 + $0xc0] sm:$0xff]
    %v70 = vld [vmem:[#allocation5 + $0xc8] sm:$0xff]
    %v71 = vld [vmem:[#allocation5 + $0xd0] sm:$0xff]
    %v72 = vld [vmem:[#allocation5 + $0xd8] sm:$0xff]
    %v73 = vld [vmem:[#allocation5 + $0xe0] sm:$0xff]
    %v74 = vld [vmem:[#allocation5 + $0xe8] sm:$0xff]
    %v75 = vld [vmem:[#allocation5 + $0xf0] sm:$0xff]
    %v76 = vld [vmem:[#allocation5 + $0xf8] sm:$0xff]
    %v77 = vld [vmem:[#allocation5 + $0x100] sm:$0xff]
    %v78 = vld [vmem:[#allocation5 + $0x108] sm:$0xff]
    %v79 = vld [vmem:[#allocation5 + $0x110] sm:$0xff]
    %v80 = vld [vmem:[#allocation5 + $0x118] sm:$0xff]
    %v81 = vld [vmem:[#allocation5 + $0x120] sm:$0xff]
    %v82 = vld [vmem:[#allocation5 + $0x128] sm:$0xff]
    %v83 = vld [vmem:[#allocation5 + $0x130] sm:$0xff]
    %v84 = vld [vmem:[#allocation5 + $0x138] sm:$0xff]
    %v85 = vld [vmem:[#allocation5 + $0x140] sm:$0xff]
    %v86 = vld [vmem:[#allocation5 + $0x148] sm:$0xff]
    %v87 = vld [vmem:[#allocation5 + $0x150] sm:$0xff]
    %v88 = vld [vmem:[#allocation5 + $0x158] sm:$0xff]
    %v89 = vld [vmem:[#allocation5 + $0x160] sm:$0xff]
    %v90 = vld [vmem:[#allocation5 + $0x168] sm:$0xff]
    %v91 = vld [vmem:[#allocation5 + $0x170] sm:$0xff]
    %v92 = vld [vmem:[#allocation5 + $0x178] sm:$0xff]
    %v93 = vld [vmem:[#allocation5 + $0x180] sm:$0xff]
    %v94 = vld [vmem:[#allocation5 + $0x188] sm:$0xff]
    %v95 = vld [vmem:[#allocation5 + $0x190] sm:$0xff]
    %v96 = vld [vmem:[#allocation5 + $0x198] sm:$0xff]
    %v97 = vld [vmem:[#allocation5 + $0x1a0] sm:$0xff]
    %v98 = vld [vmem:[#allocation5 + $0x1a8] sm:$0xff]
    %v99 = vld [vmem:[#allocation5 + $0x1b0] sm:$0xff]
    %v100 = vld [vmem:[#allocation5 + $0x1b8] sm:$0xff]
    %v101 = vld [vmem:[#allocation5 + $0x1c0] sm:$0xff]
    %v102 = vld [vmem:[#allocation5 + $0x1c8] sm:$0xff]
    %v103 = vld [vmem:[#allocation5 + $0x1d0] sm:$0xff]
    %v104 = vld [vmem:[#allocation5 + $0x1d8] sm:$0xff]
    %v105 = vld [vmem:[#allocation5 + $0x1e0] sm:$0xff]
    %v106 = vld [vmem:[#allocation5 + $0x1e8] sm:$0xff]
    %v107 = vld [vmem:[#allocation5 + $0x1f0] sm:$0xff]
    %v108 = vld [vmem:[#allocation5 + $0x1f8] sm:$0xff]
    %v109 = vld [vmem:[#allocation5 + $0x200] sm:$0xff]
    %v110 = vld [vmem:[#allocation5 + $0x208] sm:$0xff]
    %v111 = vld [vmem:[#allocation5 + $0x210] sm:$0xff]
    %v112 = vld [vmem:[#allocation5 + $0x218] sm:$0xff]
    %v113 = vld [vmem:[#allocation5 + $0x220] sm:$0xff]
    %v114 = vld [vmem:[#allocation5 + $0x228] sm:$0xff]
    %v115 = vld [vmem:[#allocation5 + $0x230] sm:$0xff]
    %v116 = vld [vmem:[#allocation5 + $0x238] sm:$0xff]
    %v117 = vld [vmem:[#allocation5 + $0x240] sm:$0xff]
    %v118 = vld [vmem:[#allocation5 + $0x248] sm:$0xff]
    %v119 = vld [vmem:[#allocation5 + $0x250] sm:$0xff]
    %v120 = vld [vmem:[#allocation5 + $0x258] sm:$0xff]
    %v121 = vld [vmem:[#allocation5 + $0x260] sm:$0xff]
    %v122 = vld [vmem:[#allocation5 + $0x268] sm:$0xff]
    %v123 = vld [vmem:[#allocation5 + $0x270] sm:$0xff]
    %v124 = vld [vmem:[#allocation5 + $0x278] sm:$0xff]
    %v125 = vld [vmem:[#allocation5 + $0x280] sm:$0xff]
    %v126 = vld [vmem:[#allocation5 + $0x288] sm:$0xff]
    %v127 = vld [vmem:[#allocation5 + $0x290] sm:$0xff]
    %v128 = vld [vmem:[#allocation5 + $0x298] sm:$0xff]
    %v129 = vld [vmem:[#allocation5 + $0x2a0] sm:$0xff]
    %v130 = vld [vmem:[#allocation5 + $0x2a8] sm:$0xff]
    %v131 = vld [vmem:[#allocation5 + $0x2b0] sm:$0xff]
    %v132 = vld [vmem:[#allocation5 + $0x2b8] sm:$0xff]
    %v133 = vld [vmem:[#allocation5 + $0x2c0] sm:$0xff]
    %v134 = vld [vmem:[#allocation5 + $0x2c8] sm:$0xff]
    %v135 = vld [vmem:[#allocation5 + $0x2d0] sm:$0xff]
    %v136 = vld [vmem:[#allocation5 + $0x2d8] sm:$0xff]
    %v137 = vld [vmem:[#allocation5 + $0x2e0] sm:$0xff]
    %v138 = vld [vmem:[#allocation5 + $0x2e8] sm:$0xff]
    %v139 = vld [vmem:[#allocation5 + $0x2f0] sm:$0xff]
    %v140 = vld [vmem:[#allocation5 + $0x2f8] sm:$0xff]
    %v141 = vld [vmem:[#allocation5 + $0x300] sm:$0xff]
    %v142 = vld [vmem:[#allocation5 + $0x308] sm:$0xff]
    %v143 = vld [vmem:[#allocation5 + $0x310] sm:$0xff]
    %v144 = vld [vmem:[#allocation5 + $0x318] sm:$0xff]
    %v145 = vld [vmem:[#allocation5 + $0x320] sm:$0xff]
    %v146 = vld [vmem:[#allocation5 + $0x328] sm:$0xff]
    %v147 = vld [vmem:[#allocation5 + $0x330] sm:$0xff]
    %v148 = vld [vmem:[#allocation5 + $0x338] sm:$0xff]
    %v149 = vld [vmem:[#allocation5 + $0x340] sm:$0xff]
    %v150 = vld [vmem:[#allocation5 + $0x348] sm:$0xff]
    %v151 = vld [vmem:[#allocation5 + $0x350] sm:$0xff]
    %v152 = vld [vmem:[#allocation5 + $0x358] sm:$0xff]
    %v153 = vld [vmem:[#allocation5 + $0x360] sm:$0xff]
    %v154 = vld [vmem:[#allocation5 + $0x368] sm:$0xff]
    %v155 = vld [vmem:[#allocation5 + $0x370] sm:$0xff]
    %v156 = vld [vmem:[#allocation5 + $0x378] sm:$0xff]
    %v157 = vld [vmem:[#allocation5 + $0x380] sm:$0xff]
    %v158 = vld [vmem:[#allocation5 + $0x388] sm:$0xff]
    %v159 = vld [vmem:[#allocation5 + $0x390] sm:$0xff]
    %v160 = vld [vmem:[#allocation5 + $0x398] sm:$0xff]
    %v161 = vld [vmem:[#allocation5 + $0x3a0] sm:$0xff]
    %v162 = vld [vmem:[#allocation5 + $0x3a8] sm:$0xff]
    %v163 = vld [vmem:[#allocation5 + $0x3b0] sm:$0xff]
    %v164 = vld [vmem:[#allocation5 + $0x3b8] sm:$0xff]
    %v165 = vld [vmem:[#allocation5 + $0x3c0] sm:$0xff]
    %v166 = vld [vmem:[#allocation5 + $0x3c8] sm:$0xff]
    %v167 = vld [vmem:[#allocation5 + $0x3d0] sm:$0xff]
    %v168 = vld [vmem:[#allocation5 + $0x3d8] sm:$0xff]
    %v169 = vld [vmem:[#allocation5 + $0x3e0] sm:$0xff]
    %v170 = vld [vmem:[#allocation5 + $0x3e8] sm:$0xff]
    %v171 = vld [vmem:[#allocation5 + $0x3f0] sm:$0xff]
    %v172 = vld [vmem:[#allocation5 + $0x3f8] sm:$0xff]
    %v173 = vld [vmem:[%s2] sm:$0x3]
    %v175 = vlaneseq
    %v176 = vshrl.u32 %v175, 7
    %v177 = vsub.s32 0, %v176
    %v178 = vrot.slane %v173, %v177
    %v179 = vlaneseq
    %v180 = vshrl.u32 %v179, 7
    %v181 = vsub.s32 1, %v180
    %v182 = vrot.slane %v173, %v181
    %v189 = vunpack.c.l.b16 %v41
    %v190 = vunpack.c.h.b16 %v41
    %v191 = vunpack.c.l.b16 %v42
    %v192 = vunpack.c.h.b16 %v42
    %v193 = vunpack.c.l.b16 %v43
    %v194 = vunpack.c.h.b16 %v43
    %v195 = vunpack.c.l.b16 %v44
    %v196 = vunpack.c.h.b16 %v44
    %v197 = vpack.c.b16 %v189, %v189
    %v198 = vpack.c.b16 %v190, %v190
    %v199 = vpack.c.b16 %v191, %v191
    %v200 = vpack.c.b16 %v192, %v192
    %v201 = vpack.c.b16 %v193, %v193
    %v202 = vpack.c.b16 %v194, %v194
    %v203 = vpack.c.b16 %v195, %v195
    %v204 = vpack.c.b16 %v196, %v196
    %v341 = vunpack.c.l.b16 %v45
    %v342 = vunpack.c.h.b16 %v45
    %v343 = vunpack.c.l.b16 %v46
    %v344 = vunpack.c.h.b16 %v46
    %v345 = vunpack.c.l.b16 %v47
    %v346 = vunpack.c.h.b16 %v47
    %v347 = vunpack.c.l.b16 %v48
    %v348 = vunpack.c.h.b16 %v48
    %v349 = vunpack.c.l.b16 %v49
    %v350 = vunpack.c.h.b16 %v49
    %v351 = vunpack.c.l.b16 %v50
    %v352 = vunpack.c.h.b16 %v50
    %v353 = vunpack.c.l.b16 %v51
    %v354 = vunpack.c.h.b16 %v51
    %v355 = vunpack.c.l.b16 %v52
    %v356 = vunpack.c.h.b16 %v52
    %v357 = vunpack.c.l.b16 %v53
    %v358 = vunpack.c.h.b16 %v53
    %v359 = vunpack.c.l.b16 %v54
    %v360 = vunpack.c.h.b16 %v54
    %v361 = vunpack.c.l.b16 %v55
    %v362 = vunpack.c.h.b16 %v55
    %v363 = vunpack.c.l.b16 %v56
    %v364 = vunpack.c.h.b16 %v56
    %v365 = vunpack.c.l.b16 %v57
    %v366 = vunpack.c.h.b16 %v57
    %v367 = vunpack.c.l.b16 %v58
    %v368 = vunpack.c.h.b16 %v58
    %v369 = vunpack.c.l.b16 %v59
    %v370 = vunpack.c.h.b16 %v59
    %v371 = vunpack.c.l.b16 %v60
    %v372 = vunpack.c.h.b16 %v60
    %v373 = vunpack.c.l.b16 %v61
    %v374 = vunpack.c.h.b16 %v61
    %v375 = vunpack.c.l.b16 %v62
    %v376 = vunpack.c.h.b16 %v62
    %v377 = vunpack.c.l.b16 %v63
    %v378 = vunpack.c.h.b16 %v63
    %v379 = vunpack.c.l.b16 %v64
    %v380 = vunpack.c.h.b16 %v64
    %v381 = vunpack.c.l.b16 %v65
    %v382 = vunpack.c.h.b16 %v65
    %v383 = vunpack.c.l.b16 %v66
    %v384 = vunpack.c.h.b16 %v66
    %v385 = vunpack.c.l.b16 %v67
    %v386 = vunpack.c.h.b16 %v67
    %v387 = vunpack.c.l.b16 %v68
    %v388 = vunpack.c.h.b16 %v68
    %v389 = vunpack.c.l.b16 %v69
    %v390 = vunpack.c.h.b16 %v69
    %v391 = vunpack.c.l.b16 %v70
    %v392 = vunpack.c.h.b16 %v70
    %v393 = vunpack.c.l.b16 %v71
    %v394 = vunpack.c.h.b16 %v71
    %v395 = vunpack.c.l.b16 %v72
    %v396 = vunpack.c.h.b16 %v72
    %v397 = vunpack.c.l.b16 %v73
    %v398 = vunpack.c.h.b16 %v73
    %v399 = vunpack.c.l.b16 %v74
    %v400 = vunpack.c.h.b16 %v74
    %v401 = vunpack.c.l.b16 %v75
    %v402 = vunpack.c.h.b16 %v75
    %v403 = vunpack.c.l.b16 %v76
    %v404 = vunpack.c.h.b16 %v76
    %v405 = vunpack.c.l.b16 %v77
    %v406 = vunpack.c.h.b16 %v77
    %v407 = vunpack.c.l.b16 %v78
    %v408 = vunpack.c.h.b16 %v78
    %v409 = vunpack.c.l.b16 %v79
    %v410 = vunpack.c.h.b16 %v79
    %v411 = vunpack.c.l.b16 %v80
    %v412 = vunpack.c.h.b16 %v80
    %v413 = vunpack.c.l.b16 %v81
    %v414 = vunpack.c.h.b16 %v81
    %v415 = vunpack.c.l.b16 %v82
    %v416 = vunpack.c.h.b16 %v82
    %v417 = vunpack.c.l.b16 %v83
    %v418 = vunpack.c.h.b16 %v83
    %v419 = vunpack.c.l.b16 %v84
    %v420 = vunpack.c.h.b16 %v84
    %v421 = vunpack.c.l.b16 %v85
    %v422 = vunpack.c.h.b16 %v85
    %v423 = vunpack.c.l.b16 %v86
    %v424 = vunpack.c.h.b16 %v86
    %v425 = vunpack.c.l.b16 %v87
    %v426 = vunpack.c.h.b16 %v87
    %v427 = vunpack.c.l.b16 %v88
    %v428 = vunpack.c.h.b16 %v88
    %v429 = vunpack.c.l.b16 %v89
    %v430 = vunpack.c.h.b16 %v89
    %v431 = vunpack.c.l.b16 %v90
    %v432 = vunpack.c.h.b16 %v90
    %v433 = vunpack.c.l.b16 %v91
    %v434 = vunpack.c.h.b16 %v91
    %v435 = vunpack.c.l.b16 %v92
    %v436 = vunpack.c.h.b16 %v92
    %v437 = vunpack.c.l.b16 %v93
    %v438 = vunpack.c.h.b16 %v93
    %v439 = vunpack.c.l.b16 %v94
    %v440 = vunpack.c.h.b16 %v94
    %v441 = vunpack.c.l.b16 %v95
    %v442 = vunpack.c.h.b16 %v95
    %v443 = vunpack.c.l.b16 %v96
    %v444 = vunpack.c.h.b16 %v96
    %v445 = vunpack.c.l.b16 %v97
    %v446 = vunpack.c.h.b16 %v97
    %v447 = vunpack.c.l.b16 %v98
    %v448 = vunpack.c.h.b16 %v98
    %v449 = vunpack.c.l.b16 %v99
    %v450 = vunpack.c.h.b16 %v99
    %v451 = vunpack.c.l.b16 %v100
    %v452 = vunpack.c.h.b16 %v100
    %v453 = vunpack.c.l.b16 %v101
    %v454 = vunpack.c.h.b16 %v101
    %v455 = vunpack.c.l.b16 %v102
    %v456 = vunpack.c.h.b16 %v102
    %v457 = vunpack.c.l.b16 %v103
    %v458 = vunpack.c.h.b16 %v103
    %v459 = vunpack.c.l.b16 %v104
    %v460 = vunpack.c.h.b16 %v104
    %v461 = vunpack.c.l.b16 %v105
    %v462 = vunpack.c.h.b16 %v105
    %v463 = vunpack.c.l.b16 %v106
    %v464 = vunpack.c.h.b16 %v106
    %v465 = vunpack.c.l.b16 %v107
    %v466 = vunpack.c.h.b16 %v107
    %v467 = vunpack.c.l.b16 %v108
    %v468 = vunpack.c.h.b16 %v108
    %v469 = vunpack.c.l.b16 %v109
    %v470 = vunpack.c.h.b16 %v109
    %v471 = vunpack.c.l.b16 %v110
    %v472 = vunpack.c.h.b16 %v110
    %v473 = vunpack.c.l.b16 %v111
    %v474 = vunpack.c.h.b16 %v111
    %v475 = vunpack.c.l.b16 %v112
    %v476 = vunpack.c.h.b16 %v112
    %v477 = vunpack.c.l.b16 %v113
    %v478 = vunpack.c.h.b16 %v113
    %v479 = vunpack.c.l.b16 %v114
    %v480 = vunpack.c.h.b16 %v114
    %v481 = vunpack.c.l.b16 %v115
    %v482 = vunpack.c.h.b16 %v115
    %v483 = vunpack.c.l.b16 %v116
    %v484 = vunpack.c.h.b16 %v116
    %v485 = vunpack.c.l.b16 %v117
    %v486 = vunpack.c.h.b16 %v117
    %v487 = vunpack.c.l.b16 %v118
    %v488 = vunpack.c.h.b16 %v118
    %v489 = vunpack.c.l.b16 %v119
    %v490 = vunpack.c.h.b16 %v119
    %v491 = vunpack.c.l.b16 %v120
    %v492 = vunpack.c.h.b16 %v120
    %v493 = vunpack.c.l.b16 %v121
    %v494 = vunpack.c.h.b16 %v121
    %v495 = vunpack.c.l.b16 %v122
    %v496 = vunpack.c.h.b16 %v122
    %v497 = vunpack.c.l.b16 %v123
    %v498 = vunpack.c.h.b16 %v123
    %v499 = vunpack.c.l.b16 %v124
    %v500 = vunpack.c.h.b16 %v124
    %v501 = vunpack.c.l.b16 %v125
    %v502 = vunpack.c.h.b16 %v125
    %v503 = vunpack.c.l.b16 %v126
    %v504 = vunpack.c.h.b16 %v126
    %v505 = vunpack.c.l.b16 %v127
    %v506 = vunpack.c.h.b16 %v127
    %v507 = vunpack.c.l.b16 %v128
    %v508 = vunpack.c.h.b16 %v128
    %v509 = vunpack.c.l.b16 %v129
    %v510 = vunpack.c.h.b16 %v129
    %v511 = vunpack.c.l.b16 %v130
    %v512 = vunpack.c.h.b16 %v130
    %v513 = vunpack.c.l.b16 %v131
    %v514 = vunpack.c.h.b16 %v131
    %v515 = vunpack.c.l.b16 %v132
    %v516 = vunpack.c.h.b16 %v132
    %v517 = vunpack.c.l.b16 %v133
    %v518 = vunpack.c.h.b16 %v133
    %v519 = vunpack.c.l.b16 %v134
    %v520 = vunpack.c.h.b16 %v134
    %v521 = vunpack.c.l.b16 %v135
    %v522 = vunpack.c.h.b16 %v135
    %v523 = vunpack.c.l.b16 %v136
    %v524 = vunpack.c.h.b16 %v136
    %v525 = vunpack.c.l.b16 %v137
    %v526 = vunpack.c.h.b16 %v137
    %v527 = vunpack.c.l.b16 %v138
    %v528 = vunpack.c.h.b16 %v138
    %v529 = vunpack.c.l.b16 %v139
    %v530 = vunpack.c.h.b16 %v139
    %v531 = vunpack.c.l.b16 %v140
    %v532 = vunpack.c.h.b16 %v140
    %v533 = vunpack.c.l.b16 %v141
    %v534 = vunpack.c.h.b16 %v141
    %v535 = vunpack.c.l.b16 %v142
    %v536 = vunpack.c.h.b16 %v142
    %v537 = vunpack.c.l.b16 %v143
    %v538 = vunpack.c.h.b16 %v143
    %v539 = vunpack.c.l.b16 %v144
    %v540 = vunpack.c.h.b16 %v144
    %v541 = vunpack.c.l.b16 %v145
    %v542 = vunpack.c.h.b16 %v145
    %v543 = vunpack.c.l.b16 %v146
    %v544 = vunpack.c.h.b16 %v146
    %v545 = vunpack.c.l.b16 %v147
    %v546 = vunpack.c.h.b16 %v147
    %v547 = vunpack.c.l.b16 %v148
    %v548 = vunpack.c.h.b16 %v148
    %v549 = vunpack.c.l.b16 %v149
    %v550 = vunpack.c.h.b16 %v149
    %v551 = vunpack.c.l.b16 %v150
    %v552 = vunpack.c.h.b16 %v150
    %v553 = vunpack.c.l.b16 %v151
    %v554 = vunpack.c.h.b16 %v151
    %v555 = vunpack.c.l.b16 %v152
    %v556 = vunpack.c.h.b16 %v152
    %v557 = vunpack.c.l.b16 %v153
    %v558 = vunpack.c.h.b16 %v153
    %v559 = vunpack.c.l.b16 %v154
    %v560 = vunpack.c.h.b16 %v154
    %v561 = vunpack.c.l.b16 %v155
    %v562 = vunpack.c.h.b16 %v155
    %v563 = vunpack.c.l.b16 %v156
    %v564 = vunpack.c.h.b16 %v156
    %v565 = vunpack.c.l.b16 %v157
    %v566 = vunpack.c.h.b16 %v157
    %v567 = vunpack.c.l.b16 %v158
    %v568 = vunpack.c.h.b16 %v158
    %v569 = vunpack.c.l.b16 %v159
    %v570 = vunpack.c.h.b16 %v159
    %v571 = vunpack.c.l.b16 %v160
    %v572 = vunpack.c.h.b16 %v160
    %v573 = vunpack.c.l.b16 %v161
    %v574 = vunpack.c.h.b16 %v161
    %v575 = vunpack.c.l.b16 %v162
    %v576 = vunpack.c.h.b16 %v162
    %v577 = vunpack.c.l.b16 %v163
    %v578 = vunpack.c.h.b16 %v163
    %v579 = vunpack.c.l.b16 %v164
    %v580 = vunpack.c.h.b16 %v164
    %v581 = vunpack.c.l.b16 %v165
    %v582 = vunpack.c.h.b16 %v165
    %v583 = vunpack.c.l.b16 %v166
    %v584 = vunpack.c.h.b16 %v166
    %v585 = vunpack.c.l.b16 %v167
    %v586 = vunpack.c.h.b16 %v167
    %v587 = vunpack.c.l.b16 %v168
    %v588 = vunpack.c.h.b16 %v168
    %v589 = vunpack.c.l.b16 %v169
    %v590 = vunpack.c.h.b16 %v169
    %v591 = vunpack.c.l.b16 %v170
    %v592 = vunpack.c.h.b16 %v170
    %v593 = vunpack.c.l.b16 %v171
    %v594 = vunpack.c.h.b16 %v171
    %v595 = vunpack.c.l.b16 %v172
    %v596 = vunpack.c.h.b16 %v172
    %v597 = vpack.c.b16 %v343, %v341
    %v598 = vpack.c.b16 %v344, %v342
    %v599 = vpack.c.b16 %v347, %v345
    %v600 = vpack.c.b16 %v348, %v346
    %v601 = vpack.c.b16 %v351, %v349
    %v602 = vpack.c.b16 %v352, %v350
    %v603 = vpack.c.b16 %v355, %v353
    %v604 = vpack.c.b16 %v356, %v354
    %v605 = vpack.c.b16 %v359, %v357
    %v606 = vpack.c.b16 %v360, %v358
    %v607 = vpack.c.b16 %v363, %v361
    %v608 = vpack.c.b16 %v364, %v362
    %v609 = vpack.c.b16 %v367, %v365
    %v610 = vpack.c.b16 %v368, %v366
    %v611 = vpack.c.b16 %v371, %v369
    %v612 = vpack.c.b16 %v372, %v370
    %v613 = vpack.c.b16 %v375, %v373
    %v614 = vpack.c.b16 %v376, %v374
    %v615 = vpack.c.b16 %v379, %v377
    %v616 = vpack.c.b16 %v380, %v378
    %v617 = vpack.c.b16 %v383, %v381
    %v618 = vpack.c.b16 %v384, %v382
    %v619 = vpack.c.b16 %v387, %v385
    %v620 = vpack.c.b16 %v388, %v386
    %v621 = vpack.c.b16 %v391, %v389
    %v622 = vpack.c.b16 %v392, %v390
    %v623 = vpack.c.b16 %v395, %v393
    %v624 = vpack.c.b16 %v396, %v394
    %v625 = vpack.c.b16 %v399, %v397
    %v626 = vpack.c.b16 %v400, %v398
    %v627 = vpack.c.b16 %v403, %v401
    %v628 = vpack.c.b16 %v404, %v402
    %v629 = vpack.c.b16 %v407, %v405
    %v630 = vpack.c.b16 %v408, %v406
    %v631 = vpack.c.b16 %v411, %v409
    %v632 = vpack.c.b16 %v412, %v410
    %v633 = vpack.c.b16 %v415, %v413
    %v634 = vpack.c.b16 %v416, %v414
    %v635 = vpack.c.b16 %v419, %v417
    %v636 = vpack.c.b16 %v420, %v418
    %v637 = vpack.c.b16 %v423, %v421
    %v638 = vpack.c.b16 %v424, %v422
    %v639 = vpack.c.b16 %v427, %v425
    %v640 = vpack.c.b16 %v428, %v426
    %v641 = vpack.c.b16 %v431, %v429
    %v642 = vpack.c.b16 %v432, %v430
    %v643 = vpack.c.b16 %v435, %v433
    %v644 = vpack.c.b16 %v436, %v434
    %v645 = vpack.c.b16 %v439, %v437
    %v646 = vpack.c.b16 %v440, %v438
    %v647 = vpack.c.b16 %v443, %v441
    %v648 = vpack.c.b16 %v444, %v442
    %v649 = vpack.c.b16 %v447, %v445
    %v650 = vpack.c.b16 %v448, %v446
    %v651 = vpack.c.b16 %v451, %v449
    %v652 = vpack.c.b16 %v452, %v450
    %v653 = vpack.c.b16 %v455, %v453
    %v654 = vpack.c.b16 %v456, %v454
    %v655 = vpack.c.b16 %v459, %v457
    %v656 = vpack.c.b16 %v460, %v458
    %v657 = vpack.c.b16 %v463, %v461
    %v658 = vpack.c.b16 %v464, %v462
    %v659 = vpack.c.b16 %v467, %v465
    %v660 = vpack.c.b16 %v468, %v466
    %v661 = vpack.c.b16 %v471, %v469
    %v662 = vpack.c.b16 %v472, %v470
    %v663 = vpack.c.b16 %v475, %v473
    %v664 = vpack.c.b16 %v476, %v474
    %v665 = vpack.c.b16 %v479, %v477
    %v666 = vpack.c.b16 %v480, %v478
    %v667 = vpack.c.b16 %v483, %v481
    %v668 = vpack.c.b16 %v484, %v482
    %v669 = vpack.c.b16 %v487, %v485
    %v670 = vpack.c.b16 %v488, %v486
    %v671 = vpack.c.b16 %v491, %v489
    %v672 = vpack.c.b16 %v492, %v490
    %v673 = vpack.c.b16 %v495, %v493
    %v674 = vpack.c.b16 %v496, %v494
    %v675 = vpack.c.b16 %v499, %v497
    %v676 = vpack.c.b16 %v500, %v498
    %v677 = vpack.c.b16 %v503, %v501
    %v678 = vpack.c.b16 %v504, %v502
    %v679 = vpack.c.b16 %v507, %v505
    %v680 = vpack.c.b16 %v508, %v506
    %v681 = vpack.c.b16 %v511, %v509
    %v682 = vpack.c.b16 %v512, %v510
    %v683 = vpack.c.b16 %v515, %v513
    %v684 = vpack.c.b16 %v516, %v514
    %v685 = vpack.c.b16 %v519, %v517
    %v686 = vpack.c.b16 %v520, %v518
    %v687 = vpack.c.b16 %v523, %v521
    %v688 = vpack.c.b16 %v524, %v522
    %v689 = vpack.c.b16 %v527, %v525
    %v690 = vpack.c.b16 %v528, %v526
    %v691 = vpack.c.b16 %v531, %v529
    %v692 = vpack.c.b16 %v532, %v530
    %v693 = vpack.c.b16 %v535, %v533
    %v694 = vpack.c.b16 %v536, %v534
    %v695 = vpack.c.b16 %v539, %v537
    %v696 = vpack.c.b16 %v540, %v538
    %v697 = vpack.c.b16 %v543, %v541
    %v698 = vpack.c.b16 %v544, %v542
    %v699 = vpack.c.b16 %v547, %v545
    %v700 = vpack.c.b16 %v548, %v546
    %v701 = vpack.c.b16 %v551, %v549
    %v702 = vpack.c.b16 %v552, %v550
    %v703 = vpack.c.b16 %v555, %v553
    %v704 = vpack.c.b16 %v556, %v554
    %v705 = vpack.c.b16 %v559, %v557
    %v706 = vpack.c.b16 %v560, %v558
    %v707 = vpack.c.b16 %v563, %v561
    %v708 = vpack.c.b16 %v564, %v562
    %v709 = vpack.c.b16 %v567, %v565
    %v710 = vpack.c.b16 %v568, %v566
    %v711 = vpack.c.b16 %v571, %v569
    %v712 = vpack.c.b16 %v572, %v570
    %v713 = vpack.c.b16 %v575, %v573
    %v714 = vpack.c.b16 %v576, %v574
    %v715 = vpack.c.b16 %v579, %v577
    %v716 = vpack.c.b16 %v580, %v578
    %v717 = vpack.c.b16 %v583, %v581
    %v718 = vpack.c.b16 %v584, %v582
    %v719 = vpack.c.b16 %v587, %v585
    %v720 = vpack.c.b16 %v588, %v586
    %v721 = vpack.c.b16 %v591, %v589
    %v722 = vpack.c.b16 %v592, %v590
    %v723 = vpack.c.b16 %v595, %v593
    %v724 = vpack.c.b16 %v596, %v594
    %853 = vmatprep.subr.bf16.mxu0 %v598
    %854 = vmatpush1.bf16.msra.mxu0 %v597
    %855 = vmatprep.subr.bf16.mxu0 %v600
    %856 = vmatpush1.bf16.msra.mxu0 %v599
    %857 = vmatprep.subr.bf16.mxu0 %v602
    %858 = vmatpush1.bf16.msra.mxu0 %v601
    %859 = vmatprep.subr.bf16.mxu0 %v604
    %860 = vmatpush1.bf16.msra.mxu0 %v603
    %861 = vmatprep.subr.bf16.mxu0 %v606
    %862 = vmatpush1.bf16.msra.mxu0 %v605
    %863 = vmatprep.subr.bf16.mxu0 %v608
    %864 = vmatpush1.bf16.msra.mxu0 %v607
    %865 = vmatprep.subr.bf16.mxu0 %v610
    %866 = vmatpush1.bf16.msra.mxu0 %v609
    %867 = vmatprep.subr.bf16.mxu0 %v612
    %868 = vmatpush1.bf16.msra.mxu0 %v611
    %869 = vmatprep.subr.bf16.mxu0 %v614
    %870 = vmatpush1.bf16.msra.mxu0 %v613
    %871 = vmatprep.subr.bf16.mxu0 %v616
    %872 = vmatpush1.bf16.msra.mxu0 %v615
    %873 = vmatprep.subr.bf16.mxu0 %v618
    %874 = vmatpush1.bf16.msra.mxu0 %v617
    %875 = vmatprep.subr.bf16.mxu0 %v620
    %876 = vmatpush1.bf16.msra.mxu0 %v619
    %877 = vmatprep.subr.bf16.mxu0 %v622
    %878 = vmatpush1.bf16.msra.mxu0 %v621
    %879 = vmatprep.subr.bf16.mxu0 %v624
    %880 = vmatpush1.bf16.msra.mxu0 %v623
    %881 = vmatprep.subr.bf16.mxu0 %v626
    %882 = vmatpush1.bf16.msra.mxu0 %v625
    %883 = vmatprep.subr.bf16.mxu0 %v628
    %884 = vmatpush1.bf16.msra.mxu0 %v627
    %885 = vmatprep.mubr.bf16.mxu0 %v198
    %886 = vmatmul.mubr.bf16.gmra.mrb[0].mxu0 %v197
    %v887 = vpop.f32.mrb[0].mxu0
    %v888 = vadd.f32 %v178, %v887
    %v889 = vpop.f32.mrb[0].mxu0
    %v890 = vadd.f32 %v182, %v889
    %v891 = vpop.f32.mrb[0].mxu0
    %v892 = vpop.f32.mrb[0].mxu0
    %893 = vdwg.mxu0
    %894 = vmatprep.subr.bf16.mxu0 %v630
    %895 = vmatpush1.bf16.msra.mxu0 %v629
    %896 = vmatprep.subr.bf16.mxu0 %v632
    %897 = vmatpush1.bf16.msra.mxu0 %v631
    %898 = vmatprep.subr.bf16.mxu0 %v634
    %899 = vmatpush1.bf16.msra.mxu0 %v633
    %900 = vmatprep.subr.bf16.mxu0 %v636
    %901 = vmatpush1.bf16.msra.mxu0 %v635
    %902 = vmatprep.subr.bf16.mxu0 %v638
    %903 = vmatpush1.bf16.msra.mxu0 %v637
    %904 = vmatprep.subr.bf16.mxu0 %v640
    %905 = vmatpush1.bf16.msra.mxu0 %v639
    %906 = vmatprep.subr.bf16.mxu0 %v642
    %907 = vmatpush1.bf16.msra.mxu0 %v641
    %908 = vmatprep.subr.bf16.mxu0 %v644
    %909 = vmatpush1.bf16.msra.mxu0 %v643
    %910 = vmatprep.subr.bf16.mxu0 %v646
    %911 = vmatpush1.bf16.msra.mxu0 %v645
    %912 = vmatprep.subr.bf16.mxu0 %v648
    %913 = vmatpush1.bf16.msra.mxu0 %v647
    %914 = vmatprep.subr.bf16.mxu0 %v650
    %915 = vmatpush1.bf16.msra.mxu0 %v649
    %916 = vmatprep.subr.bf16.mxu0 %v652
    %917 = vmatpush1.bf16.msra.mxu0 %v651
    %918 = vmatprep.subr.bf16.mxu0 %v654
    %919 = vmatpush1.bf16.msra.mxu0 %v653
    %920 = vmatprep.subr.bf16.mxu0 %v656
    %921 = vmatpush1.bf16.msra.mxu0 %v655
    %922 = vmatprep.subr.bf16.mxu0 %v658
    %923 = vmatpush1.bf16.msra.mxu0 %v657
    %924 = vmatprep.subr.bf16.mxu0 %v660
    %925 = vmatpush1.bf16.msra.mxu0 %v659
    %926 = vmatprep.mubr.bf16.mxu0 %v200
    %927 = vmatmul.mubr.bf16.gmra.mrb[0].mxu0 %v199
    %v928 = vpop.f32.mrb[0].mxu0
    %v929 = vadd.f32 %v888, %v928
    %v930 = vpop.f32.mrb[0].mxu0
    %v931 = vadd.f32 %v890, %v930
    %v932 = vpop.f32.mrb[0].mxu0
    %v933 = vpop.f32.mrb[0].mxu0
    %934 = vdwg.mxu0
    %935 = vmatprep.subr.bf16.mxu0 %v662
    %936 = vmatpush1.bf16.msra.mxu0 %v661
    %937 = vmatprep.subr.bf16.mxu0 %v664
    %938 = vmatpush1.bf16.msra.mxu0 %v663
    %939 = vmatprep.subr.bf16.mxu0 %v666
    %940 = vmatpush1.bf16.msra.mxu0 %v665
    %941 = vmatprep.subr.bf16.mxu0 %v668
    %942 = vmatpush1.bf16.msra.mxu0 %v667
    %943 = vmatprep.subr.bf16.mxu0 %v670
    %944 = vmatpush1.bf16.msra.mxu0 %v669
    %945 = vmatprep.subr.bf16.mxu0 %v672
    %946 = vmatpush1.bf16.msra.mxu0 %v671
    %947 = vmatprep.subr.bf16.mxu0 %v674
    %948 = vmatpush1.bf16.msra.mxu0 %v673
    %949 = vmatprep.subr.bf16.mxu0 %v676
    %950 = vmatpush1.bf16.msra.mxu0 %v675
    %951 = vmatprep.subr.bf16.mxu0 %v678
    %952 = vmatpush1.bf16.msra.mxu0 %v677
    %953 = vmatprep.subr.bf16.mxu0 %v680
    %954 = vmatpush1.bf16.msra.mxu0 %v679
    %955 = vmatprep.subr.bf16.mxu0 %v682
    %956 = vmatpush1.bf16.msra.mxu0 %v681
    %957 = vmatprep.subr.bf16.mxu0 %v684
    %958 = vmatpush1.bf16.msra.mxu0 %v683
    %959 = vmatprep.subr.bf16.mxu0 %v686
    %960 = vmatpush1.bf16.msra.mxu0 %v685
    %961 = vmatprep.subr.bf16.mxu0 %v688
    %962 = vmatpush1.bf16.msra.mxu0 %v687
    %963 = vmatprep.subr.bf16.mxu0 %v690
    %964 = vmatpush1.bf16.msra.mxu0 %v689
    %965 = vmatprep.subr.bf16.mxu0 %v692
    %966 = vmatpush1.bf16.msra.mxu0 %v691
    %967 = vmatprep.mubr.bf16.mxu0 %v202
    %968 = vmatmul.mubr.bf16.gmra.mrb[0].mxu0 %v201
    %v969 = vpop.f32.mrb[0].mxu0
    %v970 = vadd.f32 %v929, %v969
    %v971 = vpop.f32.mrb[0].mxu0
    %v972 = vadd.f32 %v931, %v971
    %v973 = vpop.f32.mrb[0].mxu0
    %v974 = vpop.f32.mrb[0].mxu0
    %975 = vdwg.mxu0
    %976 = vmatprep.subr.bf16.mxu0 %v694
    %977 = vmatpush1.bf16.msra.mxu0 %v693
    %978 = vmatprep.subr.bf16.mxu0 %v696
    %979 = vmatpush1.bf16.msra.mxu0 %v695
    %980 = vmatprep.subr.bf16.mxu0 %v698
    %981 = vmatpush1.bf16.msra.mxu0 %v697
    %982 = vmatprep.subr.bf16.mxu0 %v700
    %983 = vmatpush1.bf16.msra.mxu0 %v699
    %984 = vmatprep.subr.bf16.mxu0 %v702
    %985 = vmatpush1.bf16.msra.mxu0 %v701
    %986 = vmatprep.subr.bf16.mxu0 %v704
    %987 = vmatpush1.bf16.msra.mxu0 %v703
    %988 = vmatprep.subr.bf16.mxu0 %v706
    %989 = vmatpush1.bf16.msra.mxu0 %v705
    %990 = vmatprep.subr.bf16.mxu0 %v708
    %991 = vmatpush1.bf16.msra.mxu0 %v707
    %992 = vmatprep.subr.bf16.mxu0 %v710
    %993 = vmatpush1.bf16.msra.mxu0 %v709
    %994 = vmatprep.subr.bf16.mxu0 %v712
    %995 = vmatpush1.bf16.msra.mxu0 %v711
    %996 = vmatprep.subr.bf16.mxu0 %v714
    %997 = vmatpush1.bf16.msra.mxu0 %v713
    %998 = vmatprep.subr.bf16.mxu0 %v716
    %999 = vmatpush1.bf16.msra.mxu0 %v715
    %1000 = vmatprep.subr.bf16.mxu0 %v718
    %1001 = vmatpush1.bf16.msra.mxu0 %v717
    %1002 = vmatprep.subr.bf16.mxu0 %v720
    %1003 = vmatpush1.bf16.msra.mxu0 %v719
    %1004 = vmatprep.subr.bf16.mxu0 %v722
    %1005 = vmatpush1.bf16.msra.mxu0 %v721
    %1006 = vmatprep.subr.bf16.mxu0 %v724
    %1007 = vmatpush1.bf16.msra.mxu0 %v723
    %1008 = vmatprep.mubr.bf16.mxu0 %v204
    %1009 = vmatmul.mubr.bf16.gmra.mrb[0].mxu0 %v203
    %v1010 = vpop.f32.mrb[0].mxu0
    %v1011 = vadd.f32 %v970, %v1010
    %v1012 = vpop.f32.mrb[0].mxu0
    %v1013 = vadd.f32 %v972, %v1012
    %v1014 = vpop.f32.mrb[0].mxu0
    %v1015 = vpop.f32.mrb[0].mxu0
    %1016 = vdwg.mxu0
    %v1017 = vmax.f32 %v1011, 0.0
    %v1018 = vmax.f32 %v1013, 0.0
    %1019 = vst [vmem:[#allocation7] sm:$0xff] %v1017
    %1020 = vst [vmem:[#allocation7 + $0x8] sm:$0xff] %v1018
    // Predicated region
    $region22: #{tpu_custom_call.1} parent=1 // pred_check
      _
    $region23: #{tpu_custom_call.1} parent=1 // pred_check_branch
      %1022 = sbr.rel (0) target = $region25
    $region24: #{tpu_custom_call.1} parent=1 // pred_region
      %s1024 = ssub.s32 256, 256
      %1025 = vsyncadd [#allocation4], %s1024
      %s1027 = sshll.u32 [#allocation7], 4
      %s1028 = int_to_ptr.vmem [resolvable:$true] %s1027
      %1030 = dma.vmem_to_hbm [thread:$0]  %s1028, 256, %s3, [#allocation4]
    $region25: #{tpu_custom_call.1} parent=1 // pred_fallthru
      _
    // Predicated region
    $region26: #{tpu_custom_call.1} parent=1 // pred_check
      _
    $region27: #{tpu_custom_call.1} parent=1 // pred_check_branch
      %1032 = sbr.rel (0) target = $region29
    $region28: #{tpu_custom_call.1} parent=1 // pred_region
      %1033 = dma.done [#allocation4], 256
    $region29: #{tpu_custom_call.1} parent=1 // pred_fallthru
      _
    %1034 = vsyncpa [#allocation3], 1
    %1035 = vsyncpa [#allocation6], 1
    %1036 = vsyncpa [#allocation4], 1

</llo_original>
